<compile_context>
chip_gen: v7x
topology: tpu7x:2x2x1
jax: 0.10.0
libtpu: 0.0.40
codegen_flags: <defaults>
</compile_context>

<pallas_src>
import functools
import math

import jax
import jax.numpy as jnp
from jax.experimental import pallas as pl
from jax.experimental.pallas import tpu as pltpu

HEAD_PAD = 128  # lane-dense width of the fused (advantage || value || zeros) head


def _dueling_kernel(x_ref, w1_ref, b1_ref, w2_ref, b2_ref, wva_ref, bva_ref,
                    o_ref, *, out_dim):
    # ---- feature layer: Linear -> ReLU -> Linear -> ReLU (Dropout = identity)
    # bf16 operands on the MXU, f32 accumulate, f32 elementwise epilogue.
    x = x_ref[...].astype(jnp.bfloat16)                             # [TB, in_dim]
    h = jnp.dot(x, w1_ref[...], preferred_element_type=jnp.float32) + b1_ref[...]
    h = jnp.maximum(h, 0.0).astype(jnp.bfloat16)
    h = jnp.dot(h, w2_ref[...], preferred_element_type=jnp.float32) + b2_ref[...]
    h = jnp.maximum(h, 0.0).astype(jnp.bfloat16)
    # TODO(synk): nn.Dropout(0.2) is stochastic in training; identity here (eval).

    # ---- fused value||advantage head: one lane-dense MXU pass.
    # cols [0, out_dim) = advantage, col out_dim = value, remaining cols have
    # exactly-zero weights and bias, so sum over all 128 lanes == adv_sum + y1.
    y = jnp.dot(h, wva_ref[...], preferred_element_type=jnp.float32) + bva_ref[...]
    total = jnp.sum(y, axis=1, keepdims=True)          # [TB, 1] = adv_sum + y1
    y1 = y[:, out_dim:out_dim + 1]                     # value column (static slice)
    adv_sum = total - y1

    # out = value + (adv - mean(adv)); mean = sum * compile-time constant.
    # Narrow store: only the real out_dim columns are written back to HBM.
    o_ref[...] = y[:, :out_dim] + y1 - adv_sum * (1.0 / out_dim)


def _round_up(n, m):
    return ((n + m - 1) // m) * m


@functools.partial(jax.jit, static_argnames=("tile_b",))
def noisy_dueling_forward(x, params, tile_b=None):
    """x: [..., in_dim] float32. params: dict of pre-transposed f32 weights/biases."""
    in_dim = params["w1"].shape[0]
    hidden = params["w1"].shape[1]
    out_dim = params["wa"].shape[1]
    assert out_dim + 1 <= HEAD_PAD

    x = x.reshape(-1, in_dim)              # mirrors x.reshape(-1, in_dim)
    B = x.shape[0]

    if tile_b is None:
        # Single grid step: best on v5e/v6e (1 TC, per-step overhead dominates).
        # For v7x's 2 TensorCores pass tile_b=_round_up(pl.cdiv(B, 2), 16).
        tile_b = max(16, _round_up(B, 16))

    # ---- operand prep (folds/fuses under the enclosing jit) -------------------
    w1 = params["w1"].astype(jnp.bfloat16)
    w2 = params["w2"].astype(jnp.bfloat16)
    b1 = params["b1"].astype(jnp.float32)
    b2 = params["b2"].astype(jnp.float32)

    wva = jnp.zeros((hidden, HEAD_PAD), jnp.float32)
    wva = wva.at[:, :out_dim].set(params["wa"])            # advantage weights
    wva = wva.at[:, out_dim].set(params["wv"][:, 0])       # value weights
    wva = wva.astype(jnp.bfloat16)

    bva = jnp.zeros((1, HEAD_PAD), jnp.float32)
    bva = bva.at[:, :out_dim].set(params["ba"][0])
    bva = bva.at[:, out_dim].set(params["bv"][0, 0])

    grid = (pl.cdiv(B, tile_b),)
    return pl.pallas_call(
        functools.partial(_dueling_kernel, out_dim=out_dim),
        out_shape=jax.ShapeDtypeStruct((B, out_dim), jnp.float32),
        grid=grid,
        in_specs=[
            pl.BlockSpec((tile_b, in_dim), lambda i: (i, 0)),     # x: tiled on batch
            pl.BlockSpec((in_dim, hidden), lambda i: (0, 0)),     # w1 (resident)
            pl.BlockSpec((1, hidden), lambda i: (0, 0)),          # b1
            pl.BlockSpec((hidden, hidden), lambda i: (0, 0)),     # w2
            pl.BlockSpec((1, hidden), lambda i: (0, 0)),          # b2
            pl.BlockSpec((hidden, HEAD_PAD), lambda i: (0, 0)),   # fused head W
            pl.BlockSpec((1, HEAD_PAD), lambda i: (0, 0)),        # fused head b
        ],
        out_specs=pl.BlockSpec((tile_b, out_dim), lambda i: (i, 0)),
        compiler_params=pltpu.CompilerParams(
            dimension_semantics=("parallel",)),
    )(x, w1, b1, w2, b2, wva, bva)


# ---------------------------------------------------------------------------
# Deterministic parameter construction (mirrors the module's __init__ shapes)
# ---------------------------------------------------------------------------

def _scale_noise(key, size):
    # factorized gaussian noise: f(x) = sign(x) * sqrt(|x|)
    x = jax.random.normal(key, (size,), dtype=jnp.float32)
    return jnp.sign(x) * jnp.sqrt(jnp.abs(x))


def make_params(key, in_dim, out_dim, hidden=64, std_init=0.6):
    keys = jax.random.split(key, 12)

    # nn.Linear default init: U(-1/sqrt(fan_in), 1/sqrt(fan_in))
    def linear_init(kw, kb, fan_in, fan_out):
        bound = 1.0 / math.sqrt(fan_in)
        w = jax.random.uniform(kw, (fan_in, fan_out), jnp.float32, -bound, bound)
        b = jax.random.uniform(kb, (1, fan_out), jnp.float32, -bound, bound)
        return w, b

    w1, b1 = linear_init(keys[0], keys[1], in_dim, hidden)
    w2, b2 = linear_init(keys[2], keys[3], hidden, hidden)

    # NoisyLinear: effective weight = mu + sigma * eps (factorized noise)
    def noisy_init(kmu_w, kmu_b, keps_in, keps_out, fan_in, fan_out):
        mu_range = 1.0 / math.sqrt(fan_in)
        w_mu = jax.random.uniform(kmu_w, (fan_in, fan_out), jnp.float32,
                                  -mu_range, mu_range)
        b_mu = jax.random.uniform(kmu_b, (1, fan_out), jnp.float32,
                                  -mu_range, mu_range)
        w_sigma = jnp.full((fan_in, fan_out), std_init / math.sqrt(fan_in),
                           jnp.float32)
        b_sigma = jnp.full((1, fan_out), std_init / math.sqrt(fan_out),
                           jnp.float32)
        eps_in = _scale_noise(keps_in, fan_in)        # [fan_in]
        eps_out = _scale_noise(keps_out, fan_out)     # [fan_out]
        w_eps = jnp.outer(eps_in, eps_out)            # (eps_out ger eps_in)^T
        b_eps = eps_out[None, :]
        return w_mu + w_sigma * w_eps, b_mu + b_sigma * b_eps

    wv, bv = noisy_init(keys[4], keys[5], keys[6], keys[7], hidden, 1)
    wa, ba = noisy_init(keys[8], keys[9], keys[10], keys[11], hidden, out_dim)

    return dict(w1=w1, b1=b1, w2=w2, b2=b2, wv=wv, bv=bv, wa=wa, ba=ba)


def _reference(x, params):
    """Pure-JAX reference mirroring the kernel's bf16-operand / f32-accumulate math."""
    f32 = lambda a: a.astype(jnp.bfloat16).astype(jnp.float32)
    hp = jax.lax.Precision.HIGHEST
    h = jnp.maximum(jnp.dot(f32(x), f32(params["w1"]), precision=hp) + params["b1"], 0.0)
    h = jnp.maximum(jnp.dot(f32(h), f32(params["w2"]), precision=hp) + params["b2"], 0.0)
    h = f32(h)
    y1 = jnp.dot(h, f32(params["wv"]), precision=hp) + params["bv"]
    y2 = jnp.dot(h, f32(params["wa"]), precision=hp) + params["ba"]
    y2 = y2 - y2.mean(axis=1, keepdims=True)
    return y1 + y2


if __name__ == "__main__":
    key = jax.random.PRNGKey(0)
    k_x, k_p = jax.random.split(key)

    # turtlebot3: laser-scan state, 5 actions. tile_b=16 exercises a 2-step
    # batch grid with a ragged last block (B=20). Production: leave tile_b=None
    # (single step) on v5e/v6e, or round_up(cdiv(B, 2), 16) for v7x's 2 TCs.
    B, in_dim, out_dim = 20, 16, 5
    x = jax.random.normal(k_x, (B, in_dim), dtype=jnp.float32)
    params = make_params(k_p, in_dim, out_dim)

    out = noisy_dueling_forward(x, params, tile_b=16)
    out = jax.block_until_ready(out)

    ref = _reference(x, params)
    assert out.shape == (B, out_dim), out.shape
    assert jnp.allclose(out, ref, atol=1e-3, rtol=1e-3), (
        float(jnp.max(jnp.abs(out - ref))))

    print("KERNEL_OK")
</pallas_src>

<mosaic_0001>
module attributes {stable_mosaic.version = 11 : i64} {
  func.func @_dueling_kernel(%arg0: i32, %arg1: memref<16x16xf32, #tpu.memory_space<vmem>>, %arg2: memref<16x64xbf16, #tpu.memory_space<vmem>>, %arg3: memref<1x64xf32, #tpu.memory_space<vmem>>, %arg4: memref<64x64xbf16, #tpu.memory_space<vmem>>, %arg5: memref<1x64xf32, #tpu.memory_space<vmem>>, %arg6: memref<64x128xbf16, #tpu.memory_space<vmem>>, %arg7: memref<1x128xf32, #tpu.memory_space<vmem>>, %arg8: memref<16x5xf32, #tpu.memory_space<vmem>>) attributes {dimension_semantics = [#tpu.dimension_semantics<parallel>], iteration_bounds = array<i64: 2>, scalar_prefetch = 0 : i64, scratch_operands = 0 : i64, tpu.core_type = #tpu.core_type<tc>, window_params = [{transform_indices = @transform_0, window_bounds = array<i64: 16, 16>}, {pipeline_mode = #tpu.pipeline_mode<synchronous>, transform_indices = @transform_1, window_bounds = array<i64: 16, 64>}, {pipeline_mode = #tpu.pipeline_mode<synchronous>, transform_indices = @transform_2, window_bounds = array<i64: 1, 64>}, {pipeline_mode = #tpu.pipeline_mode<synchronous>, transform_indices = @transform_3, window_bounds = array<i64: 64, 64>}, {pipeline_mode = #tpu.pipeline_mode<synchronous>, transform_indices = @transform_4, window_bounds = array<i64: 1, 64>}, {pipeline_mode = #tpu.pipeline_mode<synchronous>, transform_indices = @transform_5, window_bounds = array<i64: 64, 128>}, {pipeline_mode = #tpu.pipeline_mode<synchronous>, transform_indices = @transform_6, window_bounds = array<i64: 1, 128>}, {transform_indices = @transform_7, window_bounds = array<i64: 16, 5>}]} {
    %c0 = arith.constant 0 : index
    %c0_0 = arith.constant 0 : index
    %0 = vector.load %arg1[%c0, %c0_0] : memref<16x16xf32, #tpu.memory_space<vmem>>, vector<16x16xf32>
    %1 = arith.truncf %0 : vector<16x16xf32> to vector<16x16xbf16>
    %c0_1 = arith.constant 0 : index
    %c0_2 = arith.constant 0 : index
    %2 = vector.load %arg2[%c0_1, %c0_2] : memref<16x64xbf16, #tpu.memory_space<vmem>>, vector<16x64xbf16>
    %cst = arith.constant dense<0.000000e+00> : vector<16x64xf32>
    %3 = tpu.matmul %1, %2, %cst {dimension_numbers = #tpu.dot_dimension_numbers<[1], [0], [0], [1], [0, 0, 1, 1], [], []>} : vector<16x16xbf16>, vector<16x64xbf16>, vector<16x64xf32> -> vector<16x64xf32>
    %c0_3 = arith.constant 0 : index
    %c0_4 = arith.constant 0 : index
    %4 = vector.load %arg3[%c0_3, %c0_4] : memref<1x64xf32, #tpu.memory_space<vmem>>, vector<1x64xf32>
    %5 = vector.broadcast %4 : vector<1x64xf32> to vector<16x64xf32>
    %6 = arith.addf %3, %5 : vector<16x64xf32>
    %cst_5 = arith.constant 0.000000e+00 : f32
    %7 = vector.broadcast %cst_5 : f32 to vector<16x64xf32>
    %8 = arith.maximumf %6, %7 : vector<16x64xf32>
    %9 = arith.truncf %8 : vector<16x64xf32> to vector<16x64xbf16>
    %c0_6 = arith.constant 0 : index
    %c0_7 = arith.constant 0 : index
    %10 = vector.load %arg4[%c0_6, %c0_7] : memref<64x64xbf16, #tpu.memory_space<vmem>>, vector<64x64xbf16>
    %cst_8 = arith.constant dense<0.000000e+00> : vector<16x64xf32>
    %11 = tpu.matmul %9, %10, %cst_8 {dimension_numbers = #tpu.dot_dimension_numbers<[1], [0], [0], [1], [0, 0, 1, 1], [], []>} : vector<16x64xbf16>, vector<64x64xbf16>, vector<16x64xf32> -> vector<16x64xf32>
    %c0_9 = arith.constant 0 : index
    %c0_10 = arith.constant 0 : index
    %12 = vector.load %arg5[%c0_9, %c0_10] : memref<1x64xf32, #tpu.memory_space<vmem>>, vector<1x64xf32>
    %13 = vector.broadcast %12 : vector<1x64xf32> to vector<16x64xf32>
    %14 = arith.addf %11, %13 : vector<16x64xf32>
    %cst_11 = arith.constant 0.000000e+00 : f32
    %15 = vector.broadcast %cst_11 : f32 to vector<16x64xf32>
    %16 = arith.maximumf %14, %15 : vector<16x64xf32>
    %17 = arith.truncf %16 : vector<16x64xf32> to vector<16x64xbf16>
    %c0_12 = arith.constant 0 : index
    %c0_13 = arith.constant 0 : index
    %18 = vector.load %arg6[%c0_12, %c0_13] : memref<64x128xbf16, #tpu.memory_space<vmem>>, vector<64x128xbf16>
    %cst_14 = arith.constant dense<0.000000e+00> : vector<16x128xf32>
    %19 = tpu.matmul %17, %18, %cst_14 {dimension_numbers = #tpu.dot_dimension_numbers<[1], [0], [0], [1], [0, 0, 1, 1], [], []>} : vector<16x64xbf16>, vector<64x128xbf16>, vector<16x128xf32> -> vector<16x128xf32>
    %c0_15 = arith.constant 0 : index
    %c0_16 = arith.constant 0 : index
    %20 = vector.load %arg7[%c0_15, %c0_16] : memref<1x128xf32, #tpu.memory_space<vmem>>, vector<1x128xf32>
    %21 = vector.broadcast %20 : vector<1x128xf32> to vector<16x128xf32>
    %22 = arith.addf %19, %21 : vector<16x128xf32>
    %cst_17 = arith.constant dense<0.000000e+00> : vector<16xf32>
    %23 = vector.multi_reduction <add>, %22, %cst_17 [1] : vector<16x128xf32> to vector<16xf32>
    %24 = vector.shape_cast %23 : vector<16xf32> to vector<16x1xf32>
    %25 = vector.extract_strided_slice %22 {offsets = [0, 5], sizes = [16, 1], strides = [1, 1]} : vector<16x128xf32> to vector<16x1xf32>
    %26 = arith.subf %24, %25 : vector<16x1xf32>
    %27 = vector.extract_strided_slice %22 {offsets = [0, 0], sizes = [16, 5], strides = [1, 1]} : vector<16x128xf32> to vector<16x5xf32>
    %28 = vector.broadcast %25 : vector<16x1xf32> to vector<16x5xf32>
    %29 = arith.addf %27, %28 : vector<16x5xf32>
    %cst_18 = arith.constant 2.000000e-01 : f32
    %30 = vector.broadcast %cst_18 : f32 to vector<16x1xf32>
    %31 = arith.mulf %26, %30 : vector<16x1xf32>
    %32 = vector.broadcast %31 : vector<16x1xf32> to vector<16x5xf32>
    %33 = arith.subf %29, %32 : vector<16x5xf32>
    %c0_19 = arith.constant 0 : index
    %c0_20 = arith.constant 0 : index
    %34 = vector.load %arg8[%c0_19, %c0_20] : memref<16x5xf32, #tpu.memory_space<vmem>>, vector<16x5xf32>
    tpu.vector_store %arg8[%c0_19, %c0_20], %33 {strides = array<i32>} : memref<16x5xf32, #tpu.memory_space<vmem>>, vector<16x5xf32>,
    return
  }
  func.func @transform_0(%arg0: i32) -> (i32, i32) {
    %c0_i32 = arith.constant 0 : i32
    %c0_i32_0 = arith.constant 0 : i32
    return %arg0, %c0_i32 : i32, i32
  }
  func.func @transform_1(%arg0: i32) -> (i32, i32) {
    %c0_i32 = arith.constant 0 : i32
    %c0_i32_0 = arith.constant 0 : i32
    %c0_i32_1 = arith.constant 0 : i32
    return %c0_i32, %c0_i32_0 : i32, i32
  }
  func.func @transform_2(%arg0: i32) -> (i32, i32) {
    %c0_i32 = arith.constant 0 : i32
    %c0_i32_0 = arith.constant 0 : i32
    %c0_i32_1 = arith.constant 0 : i32
    return %c0_i32, %c0_i32_0 : i32, i32
  }
  func.func @transform_3(%arg0: i32) -> (i32, i32) {
    %c0_i32 = arith.constant 0 : i32
    %c0_i32_0 = arith.constant 0 : i32
    %c0_i32_1 = arith.constant 0 : i32
    return %c0_i32, %c0_i32_0 : i32, i32
  }
  func.func @transform_4(%arg0: i32) -> (i32, i32) {
    %c0_i32 = arith.constant 0 : i32
    %c0_i32_0 = arith.constant 0 : i32
    %c0_i32_1 = arith.constant 0 : i32
    return %c0_i32, %c0_i32_0 : i32, i32
  }
  func.func @transform_5(%arg0: i32) -> (i32, i32) {
    %c0_i32 = arith.constant 0 : i32
    %c0_i32_0 = arith.constant 0 : i32
    %c0_i32_1 = arith.constant 0 : i32
    return %c0_i32, %c0_i32_0 : i32, i32
  }
  func.func @transform_6(%arg0: i32) -> (i32, i32) {
    %c0_i32 = arith.constant 0 : i32
    %c0_i32_0 = arith.constant 0 : i32
    %c0_i32_1 = arith.constant 0 : i32
    return %c0_i32, %c0_i32_0 : i32, i32
  }
  func.func @transform_7(%arg0: i32) -> (i32, i32) {
    %c0_i32 = arith.constant 0 : i32
    %c0_i32_0 = arith.constant 0 : i32
    return %arg0, %c0_i32 : i32, i32
  }
}

</mosaic_0001>

<llo_original>
// kernel: noisy_dueling_forward.1
$region0: #{noisy_dueling_forward.1}
  #allocation0 [shape = 'u32[]', space=smem, size = 0x4, offset = 0x4, fixed_abs, tag = 'smem constant byte address 0x4 - core index']
  #allocation1 [shape = 'u32[144,128]{1,0:T(1,128)}', space=vmem, size = 0x12000, scoped, tag = 'internal scratch']
  %s0 = inlined_call_operand.vmem [shape: f32[20,16], index: 0, kind: input, shape index: {}]
  %s1 = inlined_call_operand.vmem [shape: bf16[16,64], index: 1, kind: input, shape index: {}]
  %s2 = inlined_call_operand.vmem [shape: f32[1,64], index: 2, kind: input, shape index: {}]
  %s3 = inlined_call_operand.vmem [shape: bf16[64,64], index: 3, kind: input, shape index: {}]
  %s4 = inlined_call_operand.vmem [shape: f32[1,64], index: 4, kind: input, shape index: {}]
  %s5 = inlined_call_operand.vmem [shape: bf16[64,128], index: 5, kind: input, shape index: {}]
  %s6 = inlined_call_operand.vmem [shape: f32[1,128], index: 6, kind: input, shape index: {}]
  %s7 = inlined_call_operand.vmem [shape: f32[20,5], index: 7, kind: output, shape index: {}]
  %s8 = sld [smem:[#allocation0]]
  $region109: #{noisy_dueling_forward.1} parent=0
    _
  %s10 = ssub.s32 1, %s8
  %s11 = scalar_select 0, %s10, %s8
  $region1: #{noisy_dueling_forward.1} parent=0
    #allocation2 [shape = 'u8[16384]{0}', space=vmem, size = 0x4000, scoped, tag = 'output window, operand 0']
    loop: start=0, step=1, limit=4
    $region2: #{noisy_dueling_forward.1} parent=1 // loop_pre_header
      _
    $region3: #{noisy_dueling_forward.1} parent=1 // loop_header
      %s13 = sphi 0, %s17
      %p14 = scmp.ge.s32.totalorder %s13, 4
      %s23 = sphi 0, %s25
      %s26 = sphi 0, %s23
      %s27 = sphi 0, %s26
      %s43 = sphi 0, %s27
      %s47 = sphi 0, %s47
      %s49 = sphi 0, %s47
      %s50 = sphi 0, %s49
      %s64 = sphi 0, %s50
      %s68 = sphi 0, %s68
      %s70 = sphi 0, %s68
      %s71 = sphi 0, %s70
      %s85 = sphi 0, %s71
      %s89 = sphi 0, %s89
      %s91 = sphi 0, %s89
      %s92 = sphi 0, %s91
      %s106 = sphi 0, %s92
      %s110 = sphi 0, %s110
      %s112 = sphi 0, %s110
      %s113 = sphi 0, %s112
      %s127 = sphi 0, %s113
      %s131 = sphi 0, %s131
      %s133 = sphi 0, %s131
      %s134 = sphi 0, %s133
      %s148 = sphi 0, %s134
      %s152 = sphi 0, %s152
      %s154 = sphi 0, %s152
      %s155 = sphi 0, %s154
      %s169 = sphi 0, %s155
      %s175 = sphi 0, %s177
      %s178 = sphi 0, %s175
      %s179 = sphi 0, %s178
      %s195 = sphi 0, %s179
    $region4: #{noisy_dueling_forward.1} parent=1 // loop_header_branch
      %16 = sbr.rel (%p14) target = $region8
    $region5: #{noisy_dueling_forward.1} parent=1 // loop_body
      %s18 = ssub.s32 %s13, 1
      %s19 = ssub.s32 %s13, 2
      %s20 = sadd.s32 %s13, 1
      %s21 = ssub.s32 %s13, %s20
      %p22 = scmp.eq.s32.totalorder %s21, 0
      %s24 = sadd.s32 %s23, 1
      %s25 = scalar_select %p22, %s23, %s24
      %p28 = pneg %p22
      %p29 = scmp.eq.s32.totalorder %s13, 1
      %p30 = por %p28, %p29
      %p31 = scmp.ne.s32.totalorder %s23, %s26
      %p32 = scmp.eq.s32.totalorder %s13, 0
      %p33 = por %p31, %p32
      %p34 = scmp.ne.s32.totalorder %s23, %s26
      %p35 = scmp.eq.s32.totalorder %s18, 1
      %p36 = por %p34, %p35
      %p37 = scmp.ne.s32.totalorder %s26, %s27
      %p38 = scmp.eq.s32.totalorder %s18, 0
      %p39 = por %p37, %p38
      %p40 = scmp.ne.s32.totalorder %s26, %s27
      %p41 = scmp.eq.s32.totalorder %s19, 1
      %p42 = por %p40, %p41
      %p44 = scmp.ne.s32.totalorder %s27, %s43
      %p45 = scmp.eq.s32.totalorder %s19, 0
      %p46 = por %p44, %p45
      %s48 = sadd.s32 %s47, 1
      %p51 = scmp.eq.s32.totalorder %s13, 1
      %p52 = scmp.ne.s32.totalorder %s47, %s49
      %p53 = scmp.eq.s32.totalorder %s13, 0
      %p54 = por %p52, %p53
      %p55 = scmp.ne.s32.totalorder %s47, %s49
      %p56 = scmp.eq.s32.totalorder %s18, 1
      %p57 = por %p55, %p56
      %p58 = scmp.ne.s32.totalorder %s49, %s50
      %p59 = scmp.eq.s32.totalorder %s18, 0
      %p60 = por %p58, %p59
      %p61 = scmp.ne.s32.totalorder %s49, %s50
      %p62 = scmp.eq.s32.totalorder %s19, 1
      %p63 = por %p61, %p62
      %p65 = scmp.ne.s32.totalorder %s50, %s64
      %p66 = scmp.eq.s32.totalorder %s19, 0
      %p67 = por %p65, %p66
      %s69 = sadd.s32 %s68, 1
      %p72 = scmp.eq.s32.totalorder %s13, 1
      %p73 = scmp.ne.s32.totalorder %s68, %s70
      %p74 = scmp.eq.s32.totalorder %s13, 0
      %p75 = por %p73, %p74
      %p76 = scmp.ne.s32.totalorder %s68, %s70
      %p77 = scmp.eq.s32.totalorder %s18, 1
      %p78 = por %p76, %p77
      %p79 = scmp.ne.s32.totalorder %s70, %s71
      %p80 = scmp.eq.s32.totalorder %s18, 0
      %p81 = por %p79, %p80
      %p82 = scmp.ne.s32.totalorder %s70, %s71
      %p83 = scmp.eq.s32.totalorder %s19, 1
      %p84 = por %p82, %p83
      %p86 = scmp.ne.s32.totalorder %s71, %s85
      %p87 = scmp.eq.s32.totalorder %s19, 0
      %p88 = por %p86, %p87
      %s90 = sadd.s32 %s89, 1
      %p93 = scmp.eq.s32.totalorder %s13, 1
      %p94 = scmp.ne.s32.totalorder %s89, %s91
      %p95 = scmp.eq.s32.totalorder %s13, 0
      %p96 = por %p94, %p95
      %p97 = scmp.ne.s32.totalorder %s89, %s91
      %p98 = scmp.eq.s32.totalorder %s18, 1
      %p99 = por %p97, %p98
      %p100 = scmp.ne.s32.totalorder %s91, %s92
      %p101 = scmp.eq.s32.totalorder %s18, 0
      %p102 = por %p100, %p101
      %p103 = scmp.ne.s32.totalorder %s91, %s92
      %p104 = scmp.eq.s32.totalorder %s19, 1
      %p105 = por %p103, %p104
      %p107 = scmp.ne.s32.totalorder %s92, %s106
      %p108 = scmp.eq.s32.totalorder %s19, 0
      %p109 = por %p107, %p108
      %s111 = sadd.s32 %s110, 1
      %p114 = scmp.eq.s32.totalorder %s13, 1
      %p115 = scmp.ne.s32.totalorder %s110, %s112
      %p116 = scmp.eq.s32.totalorder %s13, 0
      %p117 = por %p115, %p116
      %p118 = scmp.ne.s32.totalorder %s110, %s112
      %p119 = scmp.eq.s32.totalorder %s18, 1
      %p120 = por %p118, %p119
      %p121 = scmp.ne.s32.totalorder %s112, %s113
      %p122 = scmp.eq.s32.totalorder %s18, 0
      %p123 = por %p121, %p122
      %p124 = scmp.ne.s32.totalorder %s112, %s113
      %p125 = scmp.eq.s32.totalorder %s19, 1
      %p126 = por %p124, %p125
      %p128 = scmp.ne.s32.totalorder %s113, %s127
      %p129 = scmp.eq.s32.totalorder %s19, 0
      %p130 = por %p128, %p129
      %s132 = sadd.s32 %s131, 1
      %p135 = scmp.eq.s32.totalorder %s13, 1
      %p136 = scmp.ne.s32.totalorder %s131, %s133
      %p137 = scmp.eq.s32.totalorder %s13, 0
      %p138 = por %p136, %p137
      %p139 = scmp.ne.s32.totalorder %s131, %s133
      %p140 = scmp.eq.s32.totalorder %s18, 1
      %p141 = por %p139, %p140
      %p142 = scmp.ne.s32.totalorder %s133, %s134
      %p143 = scmp.eq.s32.totalorder %s18, 0
      %p144 = por %p142, %p143
      %p145 = scmp.ne.s32.totalorder %s133, %s134
      %p146 = scmp.eq.s32.totalorder %s19, 1
      %p147 = por %p145, %p146
      %p149 = scmp.ne.s32.totalorder %s134, %s148
      %p150 = scmp.eq.s32.totalorder %s19, 0
      %p151 = por %p149, %p150
      %s153 = sadd.s32 %s152, 1
      %p156 = scmp.eq.s32.totalorder %s13, 1
      %p157 = scmp.ne.s32.totalorder %s152, %s154
      %p158 = scmp.eq.s32.totalorder %s13, 0
      %p159 = por %p157, %p158
      %p160 = scmp.ne.s32.totalorder %s152, %s154
      %p161 = scmp.eq.s32.totalorder %s18, 1
      %p162 = por %p160, %p161
      %p163 = scmp.ne.s32.totalorder %s154, %s155
      %p164 = scmp.eq.s32.totalorder %s18, 0
      %p165 = por %p163, %p164
      %p166 = scmp.ne.s32.totalorder %s154, %s155
      %p167 = scmp.eq.s32.totalorder %s19, 1
      %p168 = por %p166, %p167
      %p170 = scmp.ne.s32.totalorder %s155, %s169
      %p171 = scmp.eq.s32.totalorder %s19, 0
      %p172 = por %p170, %p171
      %s173 = ssub.s32 %s13, %s20
      %p174 = scmp.eq.s32.totalorder %s173, 0
      %s176 = sadd.s32 %s175, 1
      %s177 = scalar_select %p174, %s175, %s176
      %p180 = pneg %p174
      %p181 = scmp.eq.s32.totalorder %s13, 1
      %p182 = por %p180, %p181
      %p183 = scmp.ne.s32.totalorder %s175, %s178
      %p184 = scmp.eq.s32.totalorder %s13, 0
      %p185 = por %p183, %p184
      %p186 = scmp.ne.s32.totalorder %s175, %s178
      %p187 = scmp.eq.s32.totalorder %s18, 1
      %p188 = por %p186, %p187
      %p189 = scmp.ne.s32.totalorder %s178, %s179
      %p190 = scmp.eq.s32.totalorder %s18, 0
      %p191 = por %p189, %p190
      %p192 = scmp.ne.s32.totalorder %s178, %s179
      %p193 = scmp.eq.s32.totalorder %s19, 1
      %p194 = por %p192, %p193
      %p196 = scmp.ne.s32.totalorder %s179, %s195
      %p197 = scmp.eq.s32.totalorder %s19, 0
      %p198 = por %p196, %p197
      %p199 = scmp.le.s32.totalorder 1, %s13
      %p200 = scmp.lt.s32.totalorder %s13, 3
      %p201 = pnand %p199, %p200
      %p202 = pneg %p201
      // Predicated region
      $region9: #{noisy_dueling_forward.1} parent=5 // pred_check
        _
      $region10: #{noisy_dueling_forward.1} parent=5 // pred_check_branch
        %204 = sbr.rel (%p201) target = $region12
      $region11: #{noisy_dueling_forward.1} parent=5 // pred_region
        %s205 = ssub.s32 %s13, 1
        // Predicated region
        $region13: #{noisy_dueling_forward.1} parent=11 // pred_check
          %p206 = pneg %p60
        $region14: #{noisy_dueling_forward.1} parent=11 // pred_check_branch
          %208 = sbr.rel (%p206) target = $region16
        $region15: #{noisy_dueling_forward.1} parent=11 // pred_region
          _
        $region16: #{noisy_dueling_forward.1} parent=11 // pred_fallthru
          _
        // Predicated region
        $region17: #{noisy_dueling_forward.1} parent=11 // pred_check
          %p209 = pneg %p81
        $region18: #{noisy_dueling_forward.1} parent=11 // pred_check_branch
          %211 = sbr.rel (%p209) target = $region20
        $region19: #{noisy_dueling_forward.1} parent=11 // pred_region
          _
        $region20: #{noisy_dueling_forward.1} parent=11 // pred_fallthru
          _
        // Predicated region
        $region21: #{noisy_dueling_forward.1} parent=11 // pred_check
          %p212 = pneg %p102
        $region22: #{noisy_dueling_forward.1} parent=11 // pred_check_branch
          %214 = sbr.rel (%p212) target = $region24
        $region23: #{noisy_dueling_forward.1} parent=11 // pred_region
          _
        $region24: #{noisy_dueling_forward.1} parent=11 // pred_fallthru
          _
        // Predicated region
        $region25: #{noisy_dueling_forward.1} parent=11 // pred_check
          %p215 = pneg %p123
        $region26: #{noisy_dueling_forward.1} parent=11 // pred_check_branch
          %217 = sbr.rel (%p215) target = $region28
        $region27: #{noisy_dueling_forward.1} parent=11 // pred_region
          _
        $region28: #{noisy_dueling_forward.1} parent=11 // pred_fallthru
          _
        // Predicated region
        $region29: #{noisy_dueling_forward.1} parent=11 // pred_check
          %p218 = pneg %p144
        $region30: #{noisy_dueling_forward.1} parent=11 // pred_check_branch
          %220 = sbr.rel (%p218) target = $region32
        $region31: #{noisy_dueling_forward.1} parent=11 // pred_region
          _
        $region32: #{noisy_dueling_forward.1} parent=11 // pred_fallthru
          _
        // Predicated region
        $region33: #{noisy_dueling_forward.1} parent=11 // pred_check
          %p221 = pneg %p165
        $region34: #{noisy_dueling_forward.1} parent=11 // pred_check_branch
          %223 = sbr.rel (%p221) target = $region36
        $region35: #{noisy_dueling_forward.1} parent=11 // pred_region
          _
        $region36: #{noisy_dueling_forward.1} parent=11 // pred_fallthru
          _
      $region12: #{noisy_dueling_forward.1} parent=5 // pred_fallthru
        _
      %p224 = scmp.lt.s32.totalorder %s13, 2
      // Predicated region
      $region37: #{noisy_dueling_forward.1} parent=5 // pred_check
        %p225 = pneg %p224
      $region38: #{noisy_dueling_forward.1} parent=5 // pred_check_branch
        %227 = sbr.rel (%p225) target = $region40
      $region39: #{noisy_dueling_forward.1} parent=5 // pred_region
        // Predicated region
        $region41: #{noisy_dueling_forward.1} parent=39 // pred_check
          %p228 = pneg %p33
        $region42: #{noisy_dueling_forward.1} parent=39 // pred_check_branch
          %230 = sbr.rel (%p228) target = $region44
        $region43: #{noisy_dueling_forward.1} parent=39 // pred_region
          %s231 = smul.u32 2, %s13
          %s232 = ssub.s32 3, %s231
          %p233 = scmp.lt.s32.totalorder %s232, 2
          %s234 = scalar_select %p233, %s232, 2
          %s235 = smul.u32 128, %s234
          %p236 = scmp.lt.s32.totalorder %s231, 2
          %s237 = scalar_select %p236, %s231, 2
          %s238 = smul.addr %s237, 8
          %s239 = scalar_lea.vmem %s0, %s238
          %s240 = smul.u32 2, %s13
          %s241 = ssub.s32 3, %s240
          %p242 = scmp.lt.s32.totalorder %s241, 2
          %s243 = scalar_select %p242, %s241, 2
          %s244 = smul.u32 128, %s243
        $region44: #{noisy_dueling_forward.1} parent=39 // pred_fallthru
          _
      $region40: #{noisy_dueling_forward.1} parent=5 // pred_fallthru
        _
      %p245 = scmp.le.s32.totalorder 1, %s13
      %p246 = scmp.lt.s32.totalorder %s13, 3
      %p247 = pnand %p245, %p246
      %p248 = pneg %p247
      // Predicated region
      $region45: #{noisy_dueling_forward.1} parent=5 // pred_check
        _
      $region46: #{noisy_dueling_forward.1} parent=5 // pred_check_branch
        %250 = sbr.rel (%p247) target = $region48
      $region47: #{noisy_dueling_forward.1} parent=5 // pred_region
        %s251 = ssub.s32 %s13, 1
        %s252 = smul.u32 2, %s18
        %s253 = ssub.s32 3, %s252
        %p254 = scmp.lt.s32.totalorder %s253, 2
        %s255 = scalar_select %p254, %s253, 2
        %s256 = smul.u32 128, %s255
        %p257 = scmp.lt.s32.totalorder %s252, 2
        %s258 = scalar_select %p257, %s252, 2
        %s259 = smul.addr %s258, 8
        %s260 = scalar_lea.vmem %s0, %s259
        %p261 = pneg %p39
        %p262 = pneg %p36
        %p263 = pneg %p60
        %p264 = pneg %p57
        %p265 = pneg %p81
        %p266 = pneg %p78
        %p267 = pneg %p102
        %p268 = pneg %p99
        %p269 = pneg %p123
        %p270 = pneg %p120
        %p271 = pneg %p144
        %p272 = pneg %p141
        %p273 = pneg %p165
        %p274 = pneg %p162
        %p275 = pneg %p191
        %p276 = pneg %p188
        %s277 = sand.u32 %s178, 1
        %s278 = sand.u32 %s178, 1
        %s279 = smul.addr %s278, 16
        %s280 = scalar_lea.vmem [#allocation2], %s279
        %s281 = smul.u32 2, %s18
        %s282 = ssub.s32 3, %s281
        %p283 = scmp.lt.s32.totalorder %s282, 2
        %s284 = scalar_select %p283, %s282, 2
        %s285 = smul.u32 128, %s284
        %p286 = scmp.lt.s32.totalorder %s281, 2
        %s287 = scalar_select %p286, %s281, 2
        %s288 = smul.addr %s287, 8
        %s289 = scalar_lea.vmem %s0, %s288
        %s290 = smul.u32 2, %s18
        %s291 = ssub.s32 3, %s290
        %p292 = scmp.lt.s32.totalorder %s291, 2
        %s293 = scalar_select %p292, %s291, 2
        %s294 = smul.u32 128, %s293
        %s295 = smul.u32 2, %s18
        %s296 = ssub.s32 3, %s295
        %p297 = scmp.lt.s32.totalorder %s296, 2
        %s298 = scalar_select %p297, %s296, 2
        %s299 = smul.u32 128, %s298
        %v301 = vld [vmem:[%s289] sm:$0xff]
        %v302 = vld [vmem:[%s289 + $0x8] sm:$0xff]
        %v303 = vpack.c.bf16 %v302, %v301
        %v304 = vld [vmem:[%s1] sm:$0xf]
        %v305 = vld [vmem:[%s1 + $0x4] sm:$0xf]
        %v306 = vld [vmem:[%s2] sm:$0x1]
        %v308 = vlaneseq
        %v309 = vshrl.u32 %v308, 7
        %v310 = vsub.s32 0, %v309
        %v311 = vrot.slane %v306, %v310
        %v315 = vunpack.c.l.b16 %v304
        %v316 = vunpack.c.l.b16 %v305
        %v317 = vpack.c.b16 %v316, %v315
        %vm319 = vcmask 130048
        %v321 = vsel %vm319, %v303, 0
        %323 = vmatprep.subr.bf16.mxu0 0
        %324 = vmatpush1.bf16.msra.mxu0 %v317
        %325 = vmatprep.subr.bf16.mxu0 0
        %326 = vmatpush1.bf16.msra.mxu0 0
        %327 = vmatprep.subr.bf16.mxu0 0
        %328 = vmatpush1.bf16.msra.mxu0 0
        %329 = vmatprep.subr.bf16.mxu0 0
        %330 = vmatpush1.bf16.msra.mxu0 0
        %331 = vmatprep.subr.bf16.mxu0 0
        %332 = vmatpush1.bf16.msra.mxu0 0
        %333 = vmatprep.subr.bf16.mxu0 0
        %334 = vmatpush1.bf16.msra.mxu0 0
        %335 = vmatprep.subr.bf16.mxu0 0
        %336 = vmatpush1.bf16.msra.mxu0 0
        %337 = vmatprep.subr.bf16.mxu0 0
        %338 = vmatpush1.bf16.msra.mxu0 0
        %339 = vmatprep.subr.bf16.mxu0 0
        %340 = vmatpush1.bf16.msra.mxu0 0
        %341 = vmatprep.subr.bf16.mxu0 0
        %342 = vmatpush1.bf16.msra.mxu0 0
        %343 = vmatprep.subr.bf16.mxu0 0
        %344 = vmatpush1.bf16.msra.mxu0 0
        %345 = vmatprep.subr.bf16.mxu0 0
        %346 = vmatpush1.bf16.msra.mxu0 0
        %347 = vmatprep.subr.bf16.mxu0 0
        %348 = vmatpush1.bf16.msra.mxu0 0
        %349 = vmatprep.subr.bf16.mxu0 0
        %350 = vmatpush1.bf16.msra.mxu0 0
        %351 = vmatprep.subr.bf16.mxu0 0
        %352 = vmatpush1.bf16.msra.mxu0 0
        %353 = vmatprep.subr.bf16.mxu0 0
        %354 = vmatpush1.bf16.msra.mxu0 0
        %355 = vmatprep.mubr.bf16.mxu0 0
        %356 = vmatmul.mubr.bf16.gmra.mrb[0].mxu0 %v321
        %v357 = vpop.f32.mrb[0].mxu0
        %v358 = vadd.f32 %v311, %v357
        %v359 = vpop.f32.mrb[0].mxu0
        %v360 = vpop.f32.mrb[0].mxu0
        %v361 = vadd.f32 %v311, %v360
        %v362 = vpop.f32.mrb[0].mxu0
        %363 = vdwg.mxu0
        %v364 = vmax.f32 %v358, 0.0
        %v365 = vmax.f32 %v361, 0.0
        %v366 = vpack.c.bf16 %v365, %v364
        %v367 = vld [vmem:[%s3] sm:$0xf]
        %v368 = vld [vmem:[%s3 + $0x4] sm:$0xf]
        %v369 = vld [vmem:[%s3 + $0x8] sm:$0xf]
        %v370 = vld [vmem:[%s3 + $0xc] sm:$0xf]
        %v371 = vld [vmem:[%s3 + $0x10] sm:$0xf]
        %v372 = vld [vmem:[%s3 + $0x14] sm:$0xf]
        %v373 = vld [vmem:[%s3 + $0x18] sm:$0xf]
        %v374 = vld [vmem:[%s3 + $0x1c] sm:$0xf]
        %v375 = vld [vmem:[%s4] sm:$0x1]
        %v377 = vlaneseq
        %v378 = vshrl.u32 %v377, 7
        %v379 = vsub.s32 0, %v378
        %v380 = vrot.slane %v375, %v379
        %v390 = vunpack.c.l.b16 %v367
        %v391 = vunpack.c.l.b16 %v368
        %v392 = vunpack.c.l.b16 %v369
        %v393 = vunpack.c.l.b16 %v370
        %v394 = vunpack.c.l.b16 %v371
        %v395 = vunpack.c.l.b16 %v372
        %v396 = vunpack.c.l.b16 %v373
        %v397 = vunpack.c.l.b16 %v374
        %v398 = vpack.c.b16 %v391, %v390
        %v399 = vpack.c.b16 %v393, %v392
        %v400 = vpack.c.b16 %v395, %v394
        %v401 = vpack.c.b16 %v397, %v396
        %vm406 = vcmask 523264
        %v408 = vsel %vm406, %v366, 0
        %410 = vmatprep.subr.bf16.mxu0 0
        %411 = vmatpush1.bf16.msra.mxu0 %v398
        %412 = vmatprep.subr.bf16.mxu0 0
        %413 = vmatpush1.bf16.msra.mxu0 %v399
        %414 = vmatprep.subr.bf16.mxu0 0
        %415 = vmatpush1.bf16.msra.mxu0 %v400
        %416 = vmatprep.subr.bf16.mxu0 0
        %417 = vmatpush1.bf16.msra.mxu0 %v401
        %418 = vmatprep.subr.bf16.mxu0 0
        %419 = vmatpush1.bf16.msra.mxu0 0
        %420 = vmatprep.subr.bf16.mxu0 0
        %421 = vmatpush1.bf16.msra.mxu0 0
        %422 = vmatprep.subr.bf16.mxu0 0
        %423 = vmatpush1.bf16.msra.mxu0 0
        %424 = vmatprep.subr.bf16.mxu0 0
        %425 = vmatpush1.bf16.msra.mxu0 0
        %426 = vmatprep.subr.bf16.mxu0 0
        %427 = vmatpush1.bf16.msra.mxu0 0
        %428 = vmatprep.subr.bf16.mxu0 0
        %429 = vmatpush1.bf16.msra.mxu0 0
        %430 = vmatprep.subr.bf16.mxu0 0
        %431 = vmatpush1.bf16.msra.mxu0 0
        %432 = vmatprep.subr.bf16.mxu0 0
        %433 = vmatpush1.bf16.msra.mxu0 0
        %434 = vmatprep.subr.bf16.mxu0 0
        %435 = vmatpush1.bf16.msra.mxu0 0
        %436 = vmatprep.subr.bf16.mxu0 0
        %437 = vmatpush1.bf16.msra.mxu0 0
        %438 = vmatprep.subr.bf16.mxu0 0
        %439 = vmatpush1.bf16.msra.mxu0 0
        %440 = vmatprep.subr.bf16.mxu0 0
        %441 = vmatpush1.bf16.msra.mxu0 0
        %442 = vmatprep.mubr.bf16.mxu0 0
        %443 = vmatmul.mubr.bf16.gmra.mrb[0].mxu0 %v408
        %v444 = vpop.f32.mrb[0].mxu0
        %v445 = vadd.f32 %v380, %v444
        %v446 = vpop.f32.mrb[0].mxu0
        %v447 = vpop.f32.mrb[0].mxu0
        %v448 = vadd.f32 %v380, %v447
        %v449 = vpop.f32.mrb[0].mxu0
        %450 = vdwg.mxu0
        %v451 = vmax.f32 %v445, 0.0
        %v452 = vmax.f32 %v448, 0.0
        %v453 = vpack.c.bf16 %v452, %v451
        %v454 = vld [vmem:[%s5] sm:$0xf]
        %v455 = vld [vmem:[%s5 + $0x4] sm:$0xf]
        %v456 = vld [vmem:[%s5 + $0x8] sm:$0xf]
        %v457 = vld [vmem:[%s5 + $0xc] sm:$0xf]
        %v458 = vld [vmem:[%s5 + $0x10] sm:$0xf]
        %v459 = vld [vmem:[%s5 + $0x14] sm:$0xf]
        %v460 = vld [vmem:[%s5 + $0x18] sm:$0xf]
        %v461 = vld [vmem:[%s5 + $0x1c] sm:$0xf]
        %v462 = vld [vmem:[%s6] sm:$0x1]
        %v464 = vlaneseq
        %v465 = vshrl.u32 %v464, 7
        %v466 = vsub.s32 0, %v465
        %v467 = vrot.slane %v462, %v466
        %v477 = vunpack.c.l.b16 %v454
        %v478 = vunpack.c.l.b16 %v455
        %v479 = vunpack.c.l.b16 %v456
        %v480 = vunpack.c.l.b16 %v457
        %v481 = vunpack.c.l.b16 %v458
        %v482 = vunpack.c.l.b16 %v459
        %v483 = vunpack.c.l.b16 %v460
        %v484 = vunpack.c.l.b16 %v461
        %v485 = vpack.c.b16 %v478, %v477
        %v486 = vpack.c.b16 %v480, %v479
        %v487 = vpack.c.b16 %v482, %v481
        %v488 = vpack.c.b16 %v484, %v483
        %v494 = vsel %vm406, %v453, 0
        %496 = vmatprep.subr.bf16.mxu0 0
        %497 = vmatpush1.bf16.msra.mxu0 %v485
        %498 = vmatprep.subr.bf16.mxu0 0
        %499 = vmatpush1.bf16.msra.mxu0 %v486
        %500 = vmatprep.subr.bf16.mxu0 0
        %501 = vmatpush1.bf16.msra.mxu0 %v487
        %502 = vmatprep.subr.bf16.mxu0 0
        %503 = vmatpush1.bf16.msra.mxu0 %v488
        %504 = vmatprep.subr.bf16.mxu0 0
        %505 = vmatpush1.bf16.msra.mxu0 0
        %506 = vmatprep.subr.bf16.mxu0 0
        %507 = vmatpush1.bf16.msra.mxu0 0
        %508 = vmatprep.subr.bf16.mxu0 0
        %509 = vmatpush1.bf16.msra.mxu0 0
        %510 = vmatprep.subr.bf16.mxu0 0
        %511 = vmatpush1.bf16.msra.mxu0 0
        %512 = vmatprep.subr.bf16.mxu0 0
        %513 = vmatpush1.bf16.msra.mxu0 0
        %514 = vmatprep.subr.bf16.mxu0 0
        %515 = vmatpush1.bf16.msra.mxu0 0
        %516 = vmatprep.subr.bf16.mxu0 0
        %517 = vmatpush1.bf16.msra.mxu0 0
        %518 = vmatprep.subr.bf16.mxu0 0
        %519 = vmatpush1.bf16.msra.mxu0 0
        %520 = vmatprep.subr.bf16.mxu0 0
        %521 = vmatpush1.bf16.msra.mxu0 0
        %522 = vmatprep.subr.bf16.mxu0 0
        %523 = vmatpush1.bf16.msra.mxu0 0
        %524 = vmatprep.subr.bf16.mxu0 0
        %525 = vmatpush1.bf16.msra.mxu0 0
        %526 = vmatprep.subr.bf16.mxu0 0
        %527 = vmatpush1.bf16.msra.mxu0 0
        %528 = vmatprep.mubr.bf16.mxu0 0
        %529 = vmatmul.mubr.bf16.gmra.mrb[0].mxu0 %v494
        %v530 = vpop.f32.mrb[0].mxu0
        %v531 = vadd.f32 %v467, %v530
        %v532 = vpop.f32.mrb[0].mxu0
        %v533 = vpop.f32.mrb[0].mxu0
        %v534 = vadd.f32 %v467, %v533
        %v535 = vpop.f32.mrb[0].mxu0
        %536 = vdwg.mxu0
        %537 = vadd.xlane.f32.xlu0 %v531
        %v538 = vpop.xlane.xlu0 %537
        %539 = vadd.xlane.f32.xlu0 %v534
        %v540 = vpop.xlane.xlu0 %539
        %v541 = vsub.f32 %v538, %v531
        %v542 = vsub.f32 %v540, %v534
        %544 = vset.pattern.permute.xlu0 5
        %545 = vperm.xlu0 %544, %v531
        %v546 = vpop.permute.xlu0 %545
        %549 = vset.pattern.permute.xlu0 5
        %550 = vperm.xlu0 %549, %v534
        %v551 = vpop.permute.xlu0 %550
        %v553 = vadd.f32 %v531, %v546
        %v554 = vadd.f32 %v534, %v551
        %v555 = vmul.f32 %v541, 0.2
        %v556 = vmul.f32 %v542, 0.2
        %558 = vset.pattern.permute.xlu0 5
        %559 = vperm.xlu0 %558, %v555
        %v560 = vpop.permute.xlu0 %559
        %563 = vset.pattern.permute.xlu0 5
        %564 = vperm.xlu0 %563, %v556
        %v565 = vpop.permute.xlu0 %564
        %v567 = vsub.f32 %v553, %v560
        %v568 = vsub.f32 %v554, %v565
        %vm569 = vcmask 39936
        %570 = vst.msk [vmem:[%s280] sm:$0xff] %vm569, %v567
        %571 = vst.msk [vmem:[%s280 + $0x8] sm:$0xff] %vm569, %v568
        %s572 = sand.u32 %s178, 1
        %s573 = sand.u32 %s178, 1
        %s574 = smul.addr %s573, 16
        %s575 = scalar_lea.vmem [#allocation2], %s574
        // Predicated region
        $region49: #{noisy_dueling_forward.1} parent=47 // pred_check
          %p576 = pneg %p188
        $region50: #{noisy_dueling_forward.1} parent=47 // pred_check_branch
          %578 = sbr.rel (%p576) target = $region52
        $region51: #{noisy_dueling_forward.1} parent=47 // pred_region
          %s579 = smul.u32 2, %s18
          %s580 = ssub.s32 3, %s579
          %p581 = scmp.lt.s32.totalorder %s580, 2
          %s582 = scalar_select %p581, %s580, 2
          %s583 = smul.u32 128, %s582
          %p584 = scmp.ne.s32.totalorder 0, %s583
          %s585 = smul.addr %s579, 8
          %s586 = scalar_lea.vmem %s7, %s585
          // Predicated region
          $region53: #{noisy_dueling_forward.1} parent=51 // pred_check
            %p587 = pneg %p584
          $region54: #{noisy_dueling_forward.1} parent=51 // pred_check_branch
            %589 = sbr.rel (%p587) target = $region56
          $region55: #{noisy_dueling_forward.1} parent=51 // pred_region
            // Predicated region
            $region57: #{noisy_dueling_forward.1} parent=55 // pred_check
              _
            $region58: #{noisy_dueling_forward.1} parent=55 // pred_check_branch
              %591 = sbr.rel (0) target = $region60
            $region59: #{noisy_dueling_forward.1} parent=55 // pred_region
              // Predicated region
              $region79: #{noisy_dueling_forward.1} parent=59 // pred_check
                _
              $region80: #{noisy_dueling_forward.1} parent=59 // pred_check_branch
                %642 = sbr.rel (0) target = $region82
              $region81: #{noisy_dueling_forward.1} parent=59 // pred_region
                %s643 = sshrl.u32 %s582, 1
                // While loop
                $region83: #{noisy_dueling_forward.1} parent=81 // loop_pre_header
                  _
                $region84: #{noisy_dueling_forward.1} parent=81 // loop_header
                  %s645 = sphi 0, %s647
                  %p646 = scmp.ge.s32.totalorder %s645, %s643
                  %s650 = sphi 0, %s659
                  %s651 = sphi %s575, %s662
                  %s652 = sphi %s586, %s663
                $region85: #{noisy_dueling_forward.1} parent=81 // loop_header_branch
                  %649 = sbr.rel (%p646) target = $region89
                $region86: #{noisy_dueling_forward.1} parent=81 // loop_body
                  %v653 = vld [vmem:[%s651] sm:$0xff]
                  %654 = vst [vmem:[%s652] sm:$0xff] %v653
                  %v655 = vld [vmem:[%s651 + $0x8] sm:$0xff]
                  %656 = vst [vmem:[%s652 + $0x8] sm:$0xff] %v655
                  %s657 = sadd.s32 1, %s650
                  %p658 = scmp.ge.s32.totalorder %s657, %s643
                  %s659 = scalar_select %p658, 0, %s657
                  %s660 = smul.u32 %s659, 16
                  %s661 = smul.u32 %s659, 16
                  %s662 = scalar_lea.vmem %s575, %s660 [#allocation2]
                  %s663 = scalar_lea.vmem %s586, %s661
                $region87: #{noisy_dueling_forward.1} parent=81 // loop_footer
                  %s647 = sadd.s32 %s645, 1
                $region88: #{noisy_dueling_forward.1} parent=81 // loop_footer_branch
                  %644 = sbr.rel target = $region84
                $region89: #{noisy_dueling_forward.1} parent=81 // loop_exit
                  _
                %s664 = sshrl.u32 %s582, 1
                %s665 = sand.u32 %s582, 1
                %s666 = smul.u32 %s664, 2
                %s667 = smul.u32 8, %s666
                %s668 = scalar_lea.vmem %s575, %s667 [#allocation2]
                %s669 = smul.u32 8, %s666
                %s670 = scalar_lea.vmem %s586, %s669
                // While loop
                $region90: #{noisy_dueling_forward.1} parent=81 // loop_pre_header
                  _
                $region91: #{noisy_dueling_forward.1} parent=81 // loop_header
                  %s672 = sphi 0, %s674
                  %p673 = scmp.ge.s32.totalorder %s672, %s665
                  %s677 = sphi 0, %s684
                  %s678 = sphi %s668, %s687
                  %s679 = sphi %s670, %s688
                $region92: #{noisy_dueling_forward.1} parent=81 // loop_header_branch
                  %676 = sbr.rel (%p673) target = $region96
                $region93: #{noisy_dueling_forward.1} parent=81 // loop_body
                  %v680 = vld [vmem:[%s678] sm:$0xff]
                  %681 = vst [vmem:[%s679] sm:$0xff] %v680
                  %s682 = sadd.s32 1, %s677
                  %p683 = scmp.ge.s32.totalorder %s682, %s665
                  %s684 = scalar_select %p683, 0, %s682
                  %s685 = smul.u32 %s684, 8
                  %s686 = smul.u32 %s684, 8
                  %s687 = scalar_lea.vmem %s668, %s685 [#allocation2]
                  %s688 = scalar_lea.vmem %s670, %s686
                $region94: #{noisy_dueling_forward.1} parent=81 // loop_footer
                  %s674 = sadd.s32 %s672, 1
                $region95: #{noisy_dueling_forward.1} parent=81 // loop_footer_branch
                  %671 = sbr.rel target = $region91
                $region96: #{noisy_dueling_forward.1} parent=81 // loop_exit
                  _
              $region82: #{noisy_dueling_forward.1} parent=59 // pred_fallthru
                _
              // Predicated region
              $region97: #{noisy_dueling_forward.1} parent=59 // pred_check
                _
              $region98: #{noisy_dueling_forward.1} parent=59 // pred_check_branch
                %690 = sbr.rel target = $region100
              $region99: #{noisy_dueling_forward.1} parent=59 // pred_region
                _
              $region100: #{noisy_dueling_forward.1} parent=59 // pred_fallthru
                _
            $region60: #{noisy_dueling_forward.1} parent=55 // pred_fallthru
              _
            // Predicated region
            $region61: #{noisy_dueling_forward.1} parent=55 // pred_check
              _
            $region62: #{noisy_dueling_forward.1} parent=55 // pred_check_branch
              %593 = sbr.rel target = $region64
            $region63: #{noisy_dueling_forward.1} parent=55 // pred_region
              %s595 = sshrl.u32 %s582, 1
              // While loop
              $region65: #{noisy_dueling_forward.1} parent=63 // loop_pre_header
                _
              $region66: #{noisy_dueling_forward.1} parent=63 // loop_header
                %s597 = sphi 0, %s599
                %p598 = scmp.ge.s32.totalorder %s597, %s595
                %s602 = sphi 0, %s611
                %s603 = sphi %s575, %s614
                %s604 = sphi %s586, %s615
              $region67: #{noisy_dueling_forward.1} parent=63 // loop_header_branch
                %601 = sbr.rel (%p598) target = $region71
              $region68: #{noisy_dueling_forward.1} parent=63 // loop_body
                %v605 = vld [vmem:[%s603] sm:$0xff]
                %606 = vst [vmem:[%s604] sm:$0xff] %v605
                %v607 = vld [vmem:[%s603 + $0x8] sm:$0xff]
                %608 = vst [vmem:[%s604 + $0x8] sm:$0xff] %v607
                %s609 = sadd.s32 1, %s602
                %p610 = scmp.ge.s32.totalorder %s609, %s595
                %s611 = scalar_select %p610, 0, %s609
                %s612 = smul.u32 %s611, 16
                %s613 = smul.u32 %s611, 16
                %s614 = scalar_lea.vmem %s575, %s612 [#allocation2]
                %s615 = scalar_lea.vmem %s586, %s613
              $region69: #{noisy_dueling_forward.1} parent=63 // loop_footer
                %s599 = sadd.s32 %s597, 1
              $region70: #{noisy_dueling_forward.1} parent=63 // loop_footer_branch
                %596 = sbr.rel target = $region66
              $region71: #{noisy_dueling_forward.1} parent=63 // loop_exit
                _
              %s616 = sshrl.u32 %s582, 1
              %s617 = sand.u32 %s582, 1
              %s618 = smul.u32 %s616, 2
              %s619 = smul.u32 8, %s618
              %s620 = scalar_lea.vmem %s575, %s619 [#allocation2]
              %s621 = smul.u32 8, %s618
              %s622 = scalar_lea.vmem %s586, %s621
              // While loop
              $region72: #{noisy_dueling_forward.1} parent=63 // loop_pre_header
                _
              $region73: #{noisy_dueling_forward.1} parent=63 // loop_header
                %s624 = sphi 0, %s626
                %p625 = scmp.ge.s32.totalorder %s624, %s617
                %s629 = sphi 0, %s636
                %s630 = sphi %s620, %s639
                %s631 = sphi %s622, %s640
              $region74: #{noisy_dueling_forward.1} parent=63 // loop_header_branch
                %628 = sbr.rel (%p625) target = $region78
              $region75: #{noisy_dueling_forward.1} parent=63 // loop_body
                %v632 = vld [vmem:[%s630] sm:$0xff]
                %633 = vst [vmem:[%s631] sm:$0xff] %v632
                %s634 = sadd.s32 1, %s629
                %p635 = scmp.ge.s32.totalorder %s634, %s617
                %s636 = scalar_select %p635, 0, %s634
                %s637 = smul.u32 %s636, 8
                %s638 = smul.u32 %s636, 8
                %s639 = scalar_lea.vmem %s620, %s637 [#allocation2]
                %s640 = scalar_lea.vmem %s622, %s638
              $region76: #{noisy_dueling_forward.1} parent=63 // loop_footer
                %s626 = sadd.s32 %s624, 1
              $region77: #{noisy_dueling_forward.1} parent=63 // loop_footer_branch
                %623 = sbr.rel target = $region73
              $region78: #{noisy_dueling_forward.1} parent=63 // loop_exit
                _
            $region64: #{noisy_dueling_forward.1} parent=55 // pred_fallthru
              _
          $region56: #{noisy_dueling_forward.1} parent=51 // pred_fallthru
            _
          %691 = vnop
        $region52: #{noisy_dueling_forward.1} parent=47 // pred_fallthru
          _
      $region48: #{noisy_dueling_forward.1} parent=5 // pred_fallthru
        _
      %p692 = scmp.le.s32.totalorder 2, %s13
      // Predicated region
      $region101: #{noisy_dueling_forward.1} parent=5 // pred_check
        %p693 = pneg %p692
      $region102: #{noisy_dueling_forward.1} parent=5 // pred_check_branch
        %695 = sbr.rel (%p693) target = $region104
      $region103: #{noisy_dueling_forward.1} parent=5 // pred_region
        %s696 = ssub.s32 %s13, 2
        // Predicated region
        $region105: #{noisy_dueling_forward.1} parent=103 // pred_check
          %p697 = pneg %p194
        $region106: #{noisy_dueling_forward.1} parent=103 // pred_check_branch
          %699 = sbr.rel (%p697) target = $region108
        $region107: #{noisy_dueling_forward.1} parent=103 // pred_region
          %s700 = sand.u32 %s179, 1
          %s701 = sand.u32 %s179, 1
          %s702 = smul.addr %s701, 16
          %s703 = scalar_lea.vmem [#allocation2], %s702
        $region108: #{noisy_dueling_forward.1} parent=103 // pred_fallthru
          _
      $region104: #{noisy_dueling_forward.1} parent=5 // pred_fallthru
        _
    $region6: #{noisy_dueling_forward.1} parent=1 // loop_footer
      %s17 = sadd.s32 1, %s13
    $region7: #{noisy_dueling_forward.1} parent=1 // loop_footer_branch
      %12 = sbr.rel target = $region3
    $region8: #{noisy_dueling_forward.1} parent=1 // loop_exit
      _

</llo_original>
